<compile_context>
chip_gen: v7x
topology: tpu7x:2x2x1
jax: 0.10.0
libtpu: 0.0.40
codegen_flags: <defaults>
</compile_context>

<pallas_src>
import functools

import jax
import jax.numpy as jnp
from jax.experimental import pallas as pl
from jax.experimental.pallas import tpu as pltpu


def _round_up(a: int, b: int) -> int:
    return (a + b - 1) // b * b


# --------------------------- Pass 1: matmul + channel stats ---------------------------
def _conv_stats_kernel(x_ref, w_ref, g_ref, b_ref, y_ref, ss_ref, acc_sum, acc_sq,
                       *, m_actual, eps):
    # x_ref : (tile_m, Cin_p)  bf16        w_ref : (Cin_p, Cout_p) bf16 (resident)
    # g_ref/b_ref : (1, Cout_p) f32 (resident)
    # y_ref : (tile_m, Cout_p) f32 output  ss_ref: (8, Cout_p) f32 output (rows 0/1 = scale/shift)
    # acc_sum/acc_sq : (1, Cout_p) f32 VMEM scratch (persist across grid steps)
    i = pl.program_id(0)

    @pl.when(i == 0)
    def _():
        acc_sum[...] = jnp.zeros_like(acc_sum)
        acc_sq[...] = jnp.zeros_like(acc_sq)

    # 1x1 conv == channel matmul.  bf16 MXU operands, f32 accumulation.
    # Conv bias intentionally omitted: BN's mean subtraction cancels it exactly.
    y = jnp.dot(x_ref[...], w_ref[...], preferred_element_type=jnp.float32)
    y_ref[...] = y
    acc_sum[...] += jnp.sum(y, axis=0, keepdims=True)
    acc_sq[...] += jnp.sum(y * y, axis=0, keepdims=True)

    @pl.when(i == pl.num_programs(0) - 1)
    def _():
        inv_m = jnp.float32(1.0 / m_actual)
        mean = acc_sum[...] * inv_m
        var = jnp.maximum(acc_sq[...] * inv_m - mean * mean, 0.0)  # biased var, clamped
        scale = g_ref[...] * jax.lax.rsqrt(var + jnp.float32(eps))  # (1, Cout_p)
        shift = b_ref[...] - mean * scale                           # (1, Cout_p)
        rows = jax.lax.broadcasted_iota(jnp.int32, ss_ref.shape, 0)
        ss_ref[...] = jnp.where(rows == 0, scale, jnp.where(rows == 1, shift, 0.0))


# --------------------------- Pass 2: normalize / affine (FMA) -------------------------
def _normalize_kernel(y_ref, ss_ref, o_ref):
    scale = ss_ref[0:1, :]
    shift = ss_ref[1:2, :]
    o_ref[...] = y_ref[...] * scale + shift


# ----------------------------------- wrapper ------------------------------------------
def shortcut_projection(x_ncl, conv_w, conv_b, bn_gamma, bn_beta, *, stride=1, eps=1e-5):
    """x_ncl: (N, C_in, L).  conv_w: (C_out, C_in) (kernel_size=1 squeezed).

    conv_b is accepted for API parity with nn.Conv1d but is mathematically a no-op:
    training-mode BatchNorm removes any per-channel constant.
    """
    del conv_b
    n, c_in, _ = x_ncl.shape
    c_out = conv_w.shape[0]

    # kernel_size=1, stride=s -> every s-th position (PyTorch Conv1d semantics).
    x_strided = x_ncl[:, :, ::stride]                    # (N, C_in, L_out)
    l_out = x_strided.shape[2]
    m = n * l_out

    # Lane-dense / MXU-friendly channel padding.
    cin_pad = _round_up(c_in, 128)
    cout_pad = _round_up(c_out, 128)

    # Row tiling over M (cap tile VMEM footprint; pad M up to a tile multiple).
    m8 = _round_up(m, 8)
    row_bytes = cin_pad * 2 + 3 * cout_pad * 4           # bf16 x + f32 y/out streams per row
    max_tile = max(8, ((8 * 1024 * 1024) // (2 * row_bytes)) // 8 * 8)
    tile_m = max(8, min(512, m8, max_tile))
    m_pad = _round_up(m, tile_m)
    num_tiles = m_pad // tile_m

    # NCL -> (M, Cin): rows = (batch, position), lanes = channels; zero-pad rows + lanes.
    x_mat = jnp.transpose(x_strided, (0, 2, 1)).reshape(m, c_in)
    x_mat = jnp.pad(x_mat, ((0, m_pad - m), (0, cin_pad - c_in))).astype(jnp.bfloat16)
    w_t = jnp.pad(conv_w.T.astype(jnp.float32),
                  ((0, cin_pad - c_in), (0, cout_pad - c_out))).astype(jnp.bfloat16)
    g_row = jnp.pad(bn_gamma.astype(jnp.float32), (0, cout_pad - c_out),
                    constant_values=1.0).reshape(1, cout_pad)
    be_row = jnp.pad(bn_beta.astype(jnp.float32),
                     (0, cout_pad - c_out)).reshape(1, cout_pad)

    # Generous scoped-VMEM budget (covers double-buffered x/y tiles + resident W), <= 30 MiB
    # so it is safe on v5e/v6e (128 MiB) and v7x (64 MiB physical).
    vmem_bytes = int(min(
        30 * 1024 * 1024,
        max(4 * 1024 * 1024,
            2 * tile_m * (2 * cin_pad + 8 * cout_pad)
            + 2 * cin_pad * cout_pad * 2
            + 2 * 1024 * 1024)))

    # ---- Pass 1: y = x @ W per tile; accumulate stats; emit per-channel (scale, shift) ----
    y_mat, scale_shift = pl.pallas_call(
        functools.partial(_conv_stats_kernel, m_actual=float(m), eps=float(eps)),
        out_shape=(jax.ShapeDtypeStruct((m_pad, cout_pad), jnp.float32),
                   jax.ShapeDtypeStruct((8, cout_pad), jnp.float32)),
        grid=(num_tiles,),
        in_specs=[
            pl.BlockSpec((tile_m, cin_pad), lambda i: (i, 0)),
            pl.BlockSpec((cin_pad, cout_pad), lambda i: (0, 0)),   # W resident across tiles
            pl.BlockSpec((1, cout_pad), lambda i: (0, 0)),         # gamma resident
            pl.BlockSpec((1, cout_pad), lambda i: (0, 0)),         # beta resident
        ],
        out_specs=(
            pl.BlockSpec((tile_m, cout_pad), lambda i: (i, 0)),
            pl.BlockSpec((8, cout_pad), lambda i: (0, 0)),         # stats stay in VMEM
        ),
        scratch_shapes=[pltpu.VMEM((1, cout_pad), jnp.float32),
                        pltpu.VMEM((1, cout_pad), jnp.float32)],
        compiler_params=pltpu.CompilerParams(
            dimension_semantics=("arbitrary",),                    # carries the accumulator
            vmem_limit_bytes=vmem_bytes),
    )(x_mat, w_t, g_row, be_row)

    # ---- Pass 2: y * scale + shift, in place (aliased y buffer), parallel over tiles ----
    out_mat = pl.pallas_call(
        _normalize_kernel,
        out_shape=jax.ShapeDtypeStruct((m_pad, cout_pad), jnp.float32),
        grid=(num_tiles,),
        in_specs=[
            pl.BlockSpec((tile_m, cout_pad), lambda i: (i, 0)),
            pl.BlockSpec((8, cout_pad), lambda i: (0, 0)),
        ],
        out_specs=pl.BlockSpec((tile_m, cout_pad), lambda i: (i, 0)),
        input_output_aliases={0: 0},
        compiler_params=pltpu.CompilerParams(
            dimension_semantics=("parallel",),
            vmem_limit_bytes=vmem_bytes),
    )(y_mat, scale_shift)

    out = out_mat[:m, :c_out].reshape(n, l_out, c_out)
    return jnp.transpose(out, (0, 2, 1)).astype(x_ncl.dtype)


# ----------------------------------- references ---------------------------------------
def _reference_bf16(x_ncl, conv_w, conv_b, g, b, *, stride=1, eps=1e-5):
    """Same math as the kernel path (bf16 matmul operands, f32 BN)."""
    x_s = x_ncl[:, :, ::stride]
    y = jnp.einsum("ncl,oc->nol",
                   x_s.astype(jnp.bfloat16), conv_w.astype(jnp.bfloat16),
                   preferred_element_type=jnp.float32) + conv_b[None, :, None]
    mean = jnp.mean(y, axis=(0, 2), keepdims=True)
    var = jnp.mean((y - mean) ** 2, axis=(0, 2), keepdims=True)
    yhat = (y - mean) * jax.lax.rsqrt(var + eps)
    return yhat * g[None, :, None] + b[None, :, None]


def _reference_f32(x_ncl, conv_w, conv_b, g, b, *, stride=1, eps=1e-5):
    """Full-precision PyTorch-equivalent forward."""
    x_s = x_ncl[:, :, ::stride]
    y = jnp.einsum("ncl,oc->nol", x_s, conv_w) + conv_b[None, :, None]
    mean = jnp.mean(y, axis=(0, 2), keepdims=True)
    var = jnp.mean((y - mean) ** 2, axis=(0, 2), keepdims=True)
    yhat = (y - mean) * jax.lax.rsqrt(var + eps)
    return yhat * g[None, :, None] + b[None, :, None]


if __name__ == "__main__":
    # Small shapes consistent with the module: N=2, C_in=4, L=16, C_out=8, stride=2
    N, C_IN, L, C_OUT, STRIDE = 2, 4, 16, 8, 2

    key = jax.random.PRNGKey(0)
    k_x, k_w, k_b, _, _ = jax.random.split(key, 5)

    x = jax.random.normal(k_x, (N, C_IN, L), dtype=jnp.float32)

    bound = 1.0 / (C_IN ** 0.5)
    conv_w = jax.random.uniform(k_w, (C_OUT, C_IN), minval=-bound, maxval=bound,
                                dtype=jnp.float32)           # (C_out, C_in, 1) squeezed
    conv_b = jax.random.uniform(k_b, (C_OUT,), minval=-bound, maxval=bound,
                                dtype=jnp.float32)
    bn_gamma = jnp.ones((C_OUT,), dtype=jnp.float32)
    bn_beta = jnp.zeros((C_OUT,), dtype=jnp.float32)

    fn = jax.jit(functools.partial(shortcut_projection, stride=STRIDE))
    out = fn(x, conv_w, conv_b, bn_gamma, bn_beta)
    out = jax.block_until_ready(out)

    assert out.shape == (N, C_OUT, L // STRIDE), out.shape

    ref_bf16 = _reference_bf16(x, conv_w, conv_b, bn_gamma, bn_beta, stride=STRIDE)
    assert jnp.allclose(out, ref_bf16, atol=1e-3, rtol=1e-3), "mismatch vs bf16-matmul reference"

    ref_f32 = _reference_f32(x, conv_w, conv_b, bn_gamma, bn_beta, stride=STRIDE)
    assert jnp.allclose(out, ref_f32, atol=1e-1, rtol=1e-1), "mismatch vs f32 reference"

    print("KERNEL_OK")
</pallas_src>

<mosaic_0001>
module attributes {stable_mosaic.version = 11 : i64} {
  func.func @_normalize_kernel(%arg0: i32, %arg1: memref<16x128xf32, #tpu.memory_space<vmem>>, %arg2: memref<8x128xf32, #tpu.memory_space<vmem>>, %arg3: memref<16x128xf32, #tpu.memory_space<vmem>>) attributes {dimension_semantics = [#tpu.dimension_semantics<parallel>], iteration_bounds = array<i64: 1>, scalar_prefetch = 0 : i64, scratch_operands = 0 : i64, tpu.core_type = #tpu.core_type<tc>, window_params = [{transform_indices = @transform_0, window_bounds = array<i64: 16, 128>}, {pipeline_mode = #tpu.pipeline_mode<synchronous>, transform_indices = @transform_1, window_bounds = array<i64: 8, 128>}, {transform_indices = @transform_2, window_bounds = array<i64: 16, 128>}]} {
    %c0 = arith.constant 0 : index
    %c0_0 = arith.constant 0 : index
    %0 = vector.load %arg2[%c0, %c0_0] : memref<8x128xf32, #tpu.memory_space<vmem>>, vector<1x128xf32>
    %c1 = arith.constant 1 : index
    %c0_1 = arith.constant 0 : index
    %1 = vector.load %arg2[%c1, %c0_1] : memref<8x128xf32, #tpu.memory_space<vmem>>, vector<1x128xf32>
    %c0_2 = arith.constant 0 : index
    %c0_3 = arith.constant 0 : index
    %2 = vector.load %arg1[%c0_2, %c0_3] : memref<16x128xf32, #tpu.memory_space<vmem>>, vector<16x128xf32>
    %3 = vector.broadcast %0 : vector<1x128xf32> to vector<16x128xf32>
    %4 = arith.mulf %2, %3 : vector<16x128xf32>
    %5 = vector.broadcast %1 : vector<1x128xf32> to vector<16x128xf32>
    %6 = arith.addf %4, %5 : vector<16x128xf32>
    %c0_4 = arith.constant 0 : index
    %c0_5 = arith.constant 0 : index
    %7 = vector.load %arg3[%c0_4, %c0_5] : memref<16x128xf32, #tpu.memory_space<vmem>>, vector<16x128xf32>
    tpu.vector_store %arg3[%c0_4, %c0_5], %6 {strides = array<i32>} : memref<16x128xf32, #tpu.memory_space<vmem>>, vector<16x128xf32>,
    return
  }
  func.func @transform_0(%arg0: i32) -> (i32, i32) {
    %c0_i32 = arith.constant 0 : i32
    %c0_i32_0 = arith.constant 0 : i32
    return %arg0, %c0_i32 : i32, i32
  }
  func.func @transform_1(%arg0: i32) -> (i32, i32) {
    %c0_i32 = arith.constant 0 : i32
    %c0_i32_0 = arith.constant 0 : i32
    %c0_i32_1 = arith.constant 0 : i32
    return %c0_i32, %c0_i32_0 : i32, i32
  }
  func.func @transform_2(%arg0: i32) -> (i32, i32) {
    %c0_i32 = arith.constant 0 : i32
    %c0_i32_0 = arith.constant 0 : i32
    return %arg0, %c0_i32 : i32, i32
  }
}

module attributes {stable_mosaic.version = 11 : i64} {
  func.func @_conv_stats_kernel(%arg0: i32, %arg1: memref<16x128xbf16, #tpu.memory_space<vmem>>, %arg2: memref<128x128xbf16, #tpu.memory_space<vmem>>, %arg3: memref<1x128xf32, #tpu.memory_space<vmem>>, %arg4: memref<1x128xf32, #tpu.memory_space<vmem>>, %arg5: memref<16x128xf32, #tpu.memory_space<vmem>>, %arg6: memref<8x128xf32, #tpu.memory_space<vmem>>, %arg7: memref<1x128xf32, #tpu.memory_space<vmem>>, %arg8: memref<1x128xf32, #tpu.memory_space<vmem>>) attributes {dimension_semantics = [#tpu.dimension_semantics<arbitrary>], iteration_bounds = array<i64: 1>, scalar_prefetch = 0 : i64, scratch_operands = 2 : i64, tpu.core_type = #tpu.core_type<tc>, window_params = [{transform_indices = @transform_0, window_bounds = array<i64: 16, 128>}, {pipeline_mode = #tpu.pipeline_mode<synchronous>, transform_indices = @transform_1, window_bounds = array<i64: 128, 128>}, {pipeline_mode = #tpu.pipeline_mode<synchronous>, transform_indices = @transform_2, window_bounds = array<i64: 1, 128>}, {pipeline_mode = #tpu.pipeline_mode<synchronous>, transform_indices = @transform_3, window_bounds = array<i64: 1, 128>}, {transform_indices = @transform_4, window_bounds = array<i64: 16, 128>}, {pipeline_mode = #tpu.pipeline_mode<synchronous>, transform_indices = @transform_5, window_bounds = array<i64: 8, 128>}]} {
    %c0_i32 = arith.constant 0 : i32
    %0 = arith.cmpi eq, %arg0, %c0_i32 : i32
    %1 = arith.extui %0 : i1 to i32
    %c0_i32_0 = arith.constant 0 : i32
    %2 = arith.cmpi ne, %1, %c0_i32_0 : i32
    scf.if %2 {
      %cst_18 = arith.constant 0.000000e+00 : f32
      %21 = vector.broadcast %cst_18 : f32 to vector<1x128xf32>
      %c0_19 = arith.constant 0 : index
      %c0_20 = arith.constant 0 : index
      %22 = vector.load %arg7[%c0_19, %c0_20] : memref<1x128xf32, #tpu.memory_space<vmem>>, vector<1x128xf32>
      tpu.vector_store %arg7[%c0_19, %c0_20], %21 {strides = array<i32>} : memref<1x128xf32, #tpu.memory_space<vmem>>, vector<1x128xf32>,
      %cst_21 = arith.constant 0.000000e+00 : f32
      %23 = vector.broadcast %cst_21 : f32 to vector<1x128xf32>
      %c0_22 = arith.constant 0 : index
      %c0_23 = arith.constant 0 : index
      %24 = vector.load %arg8[%c0_22, %c0_23] : memref<1x128xf32, #tpu.memory_space<vmem>>, vector<1x128xf32>
      tpu.vector_store %arg8[%c0_22, %c0_23], %23 {strides = array<i32>} : memref<1x128xf32, #tpu.memory_space<vmem>>, vector<1x128xf32>,
    } else {
    }
    %c0 = arith.constant 0 : index
    %c0_1 = arith.constant 0 : index
    %3 = vector.load %arg1[%c0, %c0_1] : memref<16x128xbf16, #tpu.memory_space<vmem>>, vector<16x128xbf16>
    %c0_2 = arith.constant 0 : index
    %c0_3 = arith.constant 0 : index
    %4 = vector.load %arg2[%c0_2, %c0_3] : memref<128x128xbf16, #tpu.memory_space<vmem>>, vector<128x128xbf16>
    %cst = arith.constant dense<0.000000e+00> : vector<16x128xf32>
    %5 = tpu.matmul %3, %4, %cst {dimension_numbers = #tpu.dot_dimension_numbers<[1], [0], [0], [1], [0, 0, 1, 1], [], []>} : vector<16x128xbf16>, vector<128x128xbf16>, vector<16x128xf32> -> vector<16x128xf32>
    %c0_4 = arith.constant 0 : index
    %c0_5 = arith.constant 0 : index
    %6 = vector.load %arg5[%c0_4, %c0_5] : memref<16x128xf32, #tpu.memory_space<vmem>>, vector<16x128xf32>
    tpu.vector_store %arg5[%c0_4, %c0_5], %5 {strides = array<i32>} : memref<16x128xf32, #tpu.memory_space<vmem>>, vector<16x128xf32>,
    %c0_6 = arith.constant 0 : index
    %c0_7 = arith.constant 0 : index
    %7 = vector.load %arg7[%c0_6, %c0_7] : memref<1x128xf32, #tpu.memory_space<vmem>>, vector<1x128xf32>
    %cst_8 = arith.constant dense<0.000000e+00> : vector<128xf32>
    %8 = vector.multi_reduction <add>, %5, %cst_8 [0] : vector<16x128xf32> to vector<128xf32>
    %9 = vector.shape_cast %8 : vector<128xf32> to vector<1x128xf32>
    %10 = arith.addf %7, %9 : vector<1x128xf32>
    %c0_9 = arith.constant 0 : index
    %c0_10 = arith.constant 0 : index
    %11 = vector.load %arg7[%c0_9, %c0_10] : memref<1x128xf32, #tpu.memory_space<vmem>>, vector<1x128xf32>
    tpu.vector_store %arg7[%c0_9, %c0_10], %10 {strides = array<i32>} : memref<1x128xf32, #tpu.memory_space<vmem>>, vector<1x128xf32>,
    %c0_11 = arith.constant 0 : index
    %c0_12 = arith.constant 0 : index
    %12 = vector.load %arg8[%c0_11, %c0_12] : memref<1x128xf32, #tpu.memory_space<vmem>>, vector<1x128xf32>
    %13 = arith.mulf %5, %5 : vector<16x128xf32>
    %cst_13 = arith.constant dense<0.000000e+00> : vector<128xf32>
    %14 = vector.multi_reduction <add>, %13, %cst_13 [0] : vector<16x128xf32> to vector<128xf32>
    %15 = vector.shape_cast %14 : vector<128xf32> to vector<1x128xf32>
    %16 = arith.addf %12, %15 : vector<1x128xf32>
    %c0_14 = arith.constant 0 : index
    %c0_15 = arith.constant 0 : index
    %17 = vector.load %arg8[%c0_14, %c0_15] : memref<1x128xf32, #tpu.memory_space<vmem>>, vector<1x128xf32>
    tpu.vector_store %arg8[%c0_14, %c0_15], %16 {strides = array<i32>} : memref<1x128xf32, #tpu.memory_space<vmem>>, vector<1x128xf32>,
    %c0_i32_16 = arith.constant 0 : i32
    %18 = arith.cmpi eq, %arg0, %c0_i32_16 : i32
    %19 = arith.extui %18 : i1 to i32
    %c0_i32_17 = arith.constant 0 : i32
    %20 = arith.cmpi ne, %19, %c0_i32_17 : i32
    scf.if %20 {
      %c0_18 = arith.constant 0 : index
      %c0_19 = arith.constant 0 : index
      %21 = vector.load %arg7[%c0_18, %c0_19] : memref<1x128xf32, #tpu.memory_space<vmem>>, vector<1x128xf32>
      %cst_20 = arith.constant 6.250000e-02 : f32
      %22 = vector.broadcast %cst_20 : f32 to vector<1x128xf32>
      %23 = arith.mulf %21, %22 : vector<1x128xf32>
      %c0_21 = arith.constant 0 : index
      %c0_22 = arith.constant 0 : index
      %24 = vector.load %arg8[%c0_21, %c0_22] : memref<1x128xf32, #tpu.memory_space<vmem>>, vector<1x128xf32>
      %cst_23 = arith.constant 6.250000e-02 : f32
      %25 = vector.broadcast %cst_23 : f32 to vector<1x128xf32>
      %26 = arith.mulf %24, %25 : vector<1x128xf32>
      %27 = arith.mulf %23, %23 : vector<1x128xf32>
      %28 = arith.subf %26, %27 : vector<1x128xf32>
      %cst_24 = arith.constant 0.000000e+00 : f32
      %29 = vector.broadcast %cst_24 : f32 to vector<1x128xf32>
      %30 = arith.maximumf %28, %29 : vector<1x128xf32>
      %c0_25 = arith.constant 0 : index
      %c0_26 = arith.constant 0 : index
      %31 = vector.load %arg3[%c0_25, %c0_26] : memref<1x128xf32, #tpu.memory_space<vmem>>, vector<1x128xf32>
      %cst_27 = arith.constant 9.99999974E-6 : f32
      %32 = vector.broadcast %cst_27 : f32 to vector<1x128xf32>
      %33 = arith.addf %30, %32 : vector<1x128xf32>
      %34 = math.rsqrt %33 : vector<1x128xf32>
      %35 = arith.mulf %31, %34 : vector<1x128xf32>
      %c0_28 = arith.constant 0 : index
      %c0_29 = arith.constant 0 : index
      %36 = vector.load %arg4[%c0_28, %c0_29] : memref<1x128xf32, #tpu.memory_space<vmem>>, vector<1x128xf32>
      %37 = arith.mulf %23, %35 : vector<1x128xf32>
      %38 = arith.subf %36, %37 : vector<1x128xf32>
      %39 = tpu.iota {dimensions = array<i32: 0>} : vector<8x128xi32>
      %c0_i32_30 = arith.constant 0 : i32
      %40 = vector.broadcast %c0_i32_30 : i32 to vector<8x128xi32>
      %41 = arith.cmpi eq, %39, %40 : vector<8x128xi32>
      %c1_i32 = arith.constant 1 : i32
      %42 = vector.broadcast %c1_i32 : i32 to vector<8x128xi32>
      %43 = arith.cmpi eq, %39, %42 : vector<8x128xi32>
      %cst_31 = arith.constant 0.000000e+00 : f32
      %44 = vector.shape_cast %38 : vector<1x128xf32> to vector<1x128xf32>
      %45 = vector.broadcast %44 : vector<1x128xf32> to vector<8x128xf32>
      %46 = vector.broadcast %cst_31 : f32 to vector<8x128xf32>
      %47 = arith.select %43, %45, %46 : vector<8x128xi1>, vector<8x128xf32>
      %48 = vector.shape_cast %35 : vector<1x128xf32> to vector<1x128xf32>
      %49 = vector.broadcast %48 : vector<1x128xf32> to vector<8x128xf32>
      %50 = arith.select %41, %49, %47 : vector<8x128xi1>, vector<8x128xf32>
      %c0_32 = arith.constant 0 : index
      %c0_33 = arith.constant 0 : index
      %51 = vector.load %arg6[%c0_32, %c0_33] : memref<8x128xf32, #tpu.memory_space<vmem>>, vector<8x128xf32>
      tpu.vector_store %arg6[%c0_32, %c0_33], %50 {strides = array<i32>} : memref<8x128xf32, #tpu.memory_space<vmem>>, vector<8x128xf32>,
    } else {
    }
    return
  }
  func.func @transform_0(%arg0: i32) -> (i32, i32) {
    %c0_i32 = arith.constant 0 : i32
    %c0_i32_0 = arith.constant 0 : i32
    return %arg0, %c0_i32 : i32, i32
  }
  func.func @transform_1(%arg0: i32) -> (i32, i32) {
    %c0_i32 = arith.constant 0 : i32
    %c0_i32_0 = arith.constant 0 : i32
    %c0_i32_1 = arith.constant 0 : i32
    return %c0_i32, %c0_i32_0 : i32, i32
  }
  func.func @transform_2(%arg0: i32) -> (i32, i32) {
    %c0_i32 = arith.constant 0 : i32
    %c0_i32_0 = arith.constant 0 : i32
    %c0_i32_1 = arith.constant 0 : i32
    return %c0_i32, %c0_i32_0 : i32, i32
  }
  func.func @transform_3(%arg0: i32) -> (i32, i32) {
    %c0_i32 = arith.constant 0 : i32
    %c0_i32_0 = arith.constant 0 : i32
    %c0_i32_1 = arith.constant 0 : i32
    return %c0_i32, %c0_i32_0 : i32, i32
  }
  func.func @transform_4(%arg0: i32) -> (i32, i32) {
    %c0_i32 = arith.constant 0 : i32
    %c0_i32_0 = arith.constant 0 : i32
    return %arg0, %c0_i32 : i32, i32
  }
  func.func @transform_5(%arg0: i32) -> (i32, i32) {
    %c0_i32 = arith.constant 0 : i32
    %c0_i32_0 = arith.constant 0 : i32
    %c0_i32_1 = arith.constant 0 : i32
    return %c0_i32, %c0_i32_0 : i32, i32
  }
}

</mosaic_0001>

<llo_original>
// kernel: shortcut_projection.3
$region0: #{shortcut_projection.3}
  #allocation0 [shape = 'u32[]', space=smem, size = 0x4, offset = 0x4, fixed_abs, tag = 'smem constant byte address 0x4 - core index']
  #allocation1 [shape = 'u32[144,128]{1,0:T(1,128)}', space=vmem, size = 0x12000, scoped, tag = 'internal scratch']
  %s0 = inlined_call_operand.vmem [shape: f32[16,128], index: 0, kind: input, shape index: {}, may-alias: {0,2}]
  %s1 = inlined_call_operand.vmem [shape: f32[8,128], index: 1, kind: input, shape index: {}]
  %s2 = inlined_call_operand.vmem [shape: f32[16,128], index: 2, kind: output, shape index: {}, may-alias: {0,2}]
  %s3 = sld [smem:[#allocation0]]
  $region18: #{shortcut_projection.3} parent=0
    _
  %s5 = ssub.s32 1, %s3
  %s6 = scalar_select 0, %s5, %s3
  // Predicated region
  $region2: #{shortcut_projection.3} parent=0 // pred_check
    _
  $region3: #{shortcut_projection.3} parent=0 // pred_check_branch
    %8 = sbr.rel (0) target = $region5
  $region4: #{shortcut_projection.3} parent=0 // pred_region
    _
  $region5: #{shortcut_projection.3} parent=0 // pred_fallthru
    _
  // Predicated region
  $region6: #{shortcut_projection.3} parent=0 // pred_check
    _
  $region7: #{shortcut_projection.3} parent=0 // pred_check_branch
    %10 = sbr.rel (0) target = $region9
  $region8: #{shortcut_projection.3} parent=0 // pred_region
    _
  $region9: #{shortcut_projection.3} parent=0 // pred_fallthru
    _
  %v11 = vld [vmem:[%s1] sm:$0x1]
  %v12 = vld [vmem:[%s1 + $0x1] sm:$0x1]
  %v13 = vld [vmem:[%s0] sm:$0xff]
  %v14 = vld [vmem:[%s0 + $0x8] sm:$0xff]
  %v15 = vlaneseq
  %v16 = vshrl.u32 %v15, 7
  %v17 = vsub.s32 0, %v16
  %v18 = vrot.slane %v11, %v17
  %v19 = vmul.f32 %v13, %v18
  %v20 = vmul.f32 %v14, %v18
  %v21 = vlaneseq
  %v22 = vshrl.u32 %v21, 7
  %v23 = vsub.s32 0, %v22
  %v24 = vrot.slane %v12, %v23
  %v25 = vadd.f32 %v19, %v24
  %v26 = vadd.f32 %v20, %v24
  %27 = vst [vmem:[%s2] sm:$0xff] %v25
  %28 = vst [vmem:[%s2 + $0x8] sm:$0xff] %v26
  // Predicated region
  $region10: #{shortcut_projection.3} parent=0 // pred_check
    _
  $region11: #{shortcut_projection.3} parent=0 // pred_check_branch
    %30 = sbr.rel (0) target = $region13
  $region12: #{shortcut_projection.3} parent=0 // pred_region
    _
  $region13: #{shortcut_projection.3} parent=0 // pred_fallthru
    _
  // Predicated region
  $region14: #{shortcut_projection.3} parent=0 // pred_check
    _
  $region15: #{shortcut_projection.3} parent=0 // pred_check_branch
    %32 = sbr.rel (0) target = $region17
  $region16: #{shortcut_projection.3} parent=0 // pred_region
    _
  $region17: #{shortcut_projection.3} parent=0 // pred_fallthru
    _

// kernel: shortcut_projection.2
$region0: #{shortcut_projection.2}
  #allocation0 [shape = 'u32[]', space=smem, size = 0x4, offset = 0x4, fixed_abs, tag = 'smem constant byte address 0x4 - core index']
  #allocation1 [shape = 'u32[144,128]{1,0:T(1,128)}', space=vmem, size = 0x12000, scoped, tag = 'internal scratch']
  #allocation2 [shape = 'f32[1,128]{1,0:T(1,128)}', space=vmem, size = 0x200, scoped, tag = 'scratch operand']
  #allocation3 [shape = 'f32[1,128]{1,0:T(1,128)}', space=vmem, size = 0x200, scoped, tag = 'scratch operand']
  %s0 = inlined_call_operand.vmem [shape: bf16[16,128], index: 0, kind: input, shape index: {}]
  %s1 = inlined_call_operand.vmem [shape: bf16[128,128], index: 1, kind: input, shape index: {}]
  %s2 = inlined_call_operand.vmem [shape: f32[1,128], index: 2, kind: input, shape index: {}]
  %s3 = inlined_call_operand.vmem [shape: f32[1,128], index: 3, kind: input, shape index: {}]
  %s4 = inlined_call_operand.vmem [shape: f32[16,128], index: 4, kind: output, shape index: {0}]
  %s5 = inlined_call_operand.vmem [shape: f32[8,128], index: 5, kind: output, shape index: {1}]
  %6 = xla_tuple %s4, %s5
  %s7 = sld [smem:[#allocation0]]
  $region42: #{shortcut_projection.2} parent=0
    _
  %s9 = ssub.s32 1, %s7
  %s10 = scalar_select 0, %s9, %s7
  // Predicated region
  $region2: #{shortcut_projection.2} parent=0 // pred_check
    _
  $region3: #{shortcut_projection.2} parent=0 // pred_check_branch
    %12 = sbr.rel (0) target = $region5
  $region4: #{shortcut_projection.2} parent=0 // pred_region
    _
  $region5: #{shortcut_projection.2} parent=0 // pred_fallthru
    _
  // Predicated region
  $region6: #{shortcut_projection.2} parent=0 // pred_check
    _
  $region7: #{shortcut_projection.2} parent=0 // pred_check_branch
    %14 = sbr.rel (0) target = $region9
  $region8: #{shortcut_projection.2} parent=0 // pred_region
    _
  $region9: #{shortcut_projection.2} parent=0 // pred_fallthru
    _
  // Predicated region
  $region10: #{shortcut_projection.2} parent=0 // pred_check
    _
  $region11: #{shortcut_projection.2} parent=0 // pred_check_branch
    %16 = sbr.rel (0) target = $region13
  $region12: #{shortcut_projection.2} parent=0 // pred_region
    _
  $region13: #{shortcut_projection.2} parent=0 // pred_fallthru
    _
  // Predicated region
  $region14: #{shortcut_projection.2} parent=0 // pred_check
    _
  $region15: #{shortcut_projection.2} parent=0 // pred_check_branch
    %18 = sbr.rel (0) target = $region17
  $region16: #{shortcut_projection.2} parent=0 // pred_region
    _
  $region17: #{shortcut_projection.2} parent=0 // pred_fallthru
    _
  %p20 = scmp.eq.s32.totalorder 0, 0
  // Predicated region
  $region18: #{shortcut_projection.2} parent=0 // pred_check
    %p21 = pneg %p20
  $region19: #{shortcut_projection.2} parent=0 // pred_check_branch
    %23 = sbr.rel (%p21) target = $region21
  $region20: #{shortcut_projection.2} parent=0 // pred_region
    %24 = vst [vmem:[#allocation2] sm:$0x1] 0.0
    %25 = vst [vmem:[#allocation3] sm:$0x1] 0.0
  $region21: #{shortcut_projection.2} parent=0 // pred_fallthru
    _
  %v26 = vld [vmem:[%s0] sm:$0xf]
  %v27 = vld [vmem:[%s0 + $0x4] sm:$0xf]
  %v28 = vld [vmem:[%s1] sm:$0xf]
  %v29 = vld [vmem:[%s1 + $0x4] sm:$0xf]
  %v30 = vld [vmem:[%s1 + $0x8] sm:$0xf]
  %v31 = vld [vmem:[%s1 + $0xc] sm:$0xf]
  %v32 = vld [vmem:[%s1 + $0x10] sm:$0xf]
  %v33 = vld [vmem:[%s1 + $0x14] sm:$0xf]
  %v34 = vld [vmem:[%s1 + $0x18] sm:$0xf]
  %v35 = vld [vmem:[%s1 + $0x1c] sm:$0xf]
  %v36 = vld [vmem:[%s1 + $0x20] sm:$0xf]
  %v37 = vld [vmem:[%s1 + $0x24] sm:$0xf]
  %v38 = vld [vmem:[%s1 + $0x28] sm:$0xf]
  %v39 = vld [vmem:[%s1 + $0x2c] sm:$0xf]
  %v40 = vld [vmem:[%s1 + $0x30] sm:$0xf]
  %v41 = vld [vmem:[%s1 + $0x34] sm:$0xf]
  %v42 = vld [vmem:[%s1 + $0x38] sm:$0xf]
  %v43 = vld [vmem:[%s1 + $0x3c] sm:$0xf]
  %v46 = vunpack.c.l.b16 %v26
  %v47 = vunpack.c.l.b16 %v27
  %v48 = vpack.c.b16 %v47, %v46
  %v66 = vunpack.c.l.b16 %v28
  %v67 = vunpack.c.l.b16 %v29
  %v68 = vunpack.c.l.b16 %v30
  %v69 = vunpack.c.l.b16 %v31
  %v70 = vunpack.c.l.b16 %v32
  %v71 = vunpack.c.l.b16 %v33
  %v72 = vunpack.c.l.b16 %v34
  %v73 = vunpack.c.l.b16 %v35
  %v74 = vunpack.c.l.b16 %v36
  %v75 = vunpack.c.l.b16 %v37
  %v76 = vunpack.c.l.b16 %v38
  %v77 = vunpack.c.l.b16 %v39
  %v78 = vunpack.c.l.b16 %v40
  %v79 = vunpack.c.l.b16 %v41
  %v80 = vunpack.c.l.b16 %v42
  %v81 = vunpack.c.l.b16 %v43
  %v82 = vpack.c.b16 %v67, %v66
  %v83 = vpack.c.b16 %v69, %v68
  %v84 = vpack.c.b16 %v71, %v70
  %v85 = vpack.c.b16 %v73, %v72
  %v86 = vpack.c.b16 %v75, %v74
  %v87 = vpack.c.b16 %v77, %v76
  %v88 = vpack.c.b16 %v79, %v78
  %v89 = vpack.c.b16 %v81, %v80
  %98 = vmatprep.subr.bf16.mxu0 0
  %99 = vmatpush1.bf16.msra.mxu0 %v82
  %100 = vmatprep.subr.bf16.mxu0 0
  %101 = vmatpush1.bf16.msra.mxu0 %v83
  %102 = vmatprep.subr.bf16.mxu0 0
  %103 = vmatpush1.bf16.msra.mxu0 %v84
  %104 = vmatprep.subr.bf16.mxu0 0
  %105 = vmatpush1.bf16.msra.mxu0 %v85
  %106 = vmatprep.subr.bf16.mxu0 0
  %107 = vmatpush1.bf16.msra.mxu0 %v86
  %108 = vmatprep.subr.bf16.mxu0 0
  %109 = vmatpush1.bf16.msra.mxu0 %v87
  %110 = vmatprep.subr.bf16.mxu0 0
  %111 = vmatpush1.bf16.msra.mxu0 %v88
  %112 = vmatprep.subr.bf16.mxu0 0
  %113 = vmatpush1.bf16.msra.mxu0 %v89
  %114 = vmatprep.subr.bf16.mxu0 0
  %115 = vmatpush1.bf16.msra.mxu0 0
  %116 = vmatprep.subr.bf16.mxu0 0
  %117 = vmatpush1.bf16.msra.mxu0 0
  %118 = vmatprep.subr.bf16.mxu0 0
  %119 = vmatpush1.bf16.msra.mxu0 0
  %120 = vmatprep.subr.bf16.mxu0 0
  %121 = vmatpush1.bf16.msra.mxu0 0
  %122 = vmatprep.subr.bf16.mxu0 0
  %123 = vmatpush1.bf16.msra.mxu0 0
  %124 = vmatprep.subr.bf16.mxu0 0
  %125 = vmatpush1.bf16.msra.mxu0 0
  %126 = vmatprep.subr.bf16.mxu0 0
  %127 = vmatpush1.bf16.msra.mxu0 0
  %128 = vmatprep.subr.bf16.mxu0 0
  %129 = vmatpush1.bf16.msra.mxu0 0
  %130 = vmatprep.mubr.bf16.mxu0 0
  %131 = vmatmul.mubr.bf16.gmra.mrb[0].mxu0 %v48
  %v132 = vpop.f32.mrb[0].mxu0
  %v133 = vadd.f32 0.0, %v132
  %v134 = vpop.f32.mrb[0].mxu0
  %v135 = vpop.f32.mrb[0].mxu0
  %v136 = vadd.f32 0.0, %v135
  %v137 = vpop.f32.mrb[0].mxu0
  %138 = vdwg.mxu0
  %139 = vst [vmem:[%s4] sm:$0xff] %v133
  %140 = vst [vmem:[%s4 + $0x8] sm:$0xff] %v136
  %v141 = vld [vmem:[#allocation2] sm:$0x1]
  %v142 = vadd.f32 %v133, %v136
  %v143 = vrot.slane %v142, 4
  %v144 = vadd.f32 %v142, %v143
  %v145 = vrot.slane %v144, 2
  %v146 = vadd.f32 %v144, %v145
  %v147 = vrot.slane %v146, 1
  %v148 = vadd.f32 %v146, %v147
  %v149 = vadd.f32 %v141, %v148
  %150 = vst [vmem:[#allocation2] sm:$0x1] %v149
  %v151 = vld [vmem:[#allocation3] sm:$0x1]
  %v152 = vmul.f32 %v133, %v133
  %v153 = vmul.f32 %v136, %v136
  %v154 = vadd.f32 %v152, %v153
  %v155 = vrot.slane %v154, 4
  %v156 = vadd.f32 %v154, %v155
  %v157 = vrot.slane %v156, 2
  %v158 = vadd.f32 %v156, %v157
  %v159 = vrot.slane %v158, 1
  %v160 = vadd.f32 %v158, %v159
  %v161 = vadd.f32 %v151, %v160
  %162 = vst [vmem:[#allocation3] sm:$0x1] %v161
  // Predicated region
  $region22: #{shortcut_projection.2} parent=0 // pred_check
    %p163 = pneg %p20
  $region23: #{shortcut_projection.2} parent=0 // pred_check_branch
    %165 = sbr.rel (%p163) target = $region25
  $region24: #{shortcut_projection.2} parent=0 // pred_region
    %v166 = vld [vmem:[#allocation2] sm:$0x1]
    %v167 = vmul.f32 %v166, 0.0625
    %v168 = vld [vmem:[#allocation3] sm:$0x1]
    %v169 = vmul.f32 %v168, 0.0625
    %v170 = vmul.f32 %v167, %v167
    %v171 = vsub.f32 %v169, %v170
    %v172 = vmax.f32 %v171, 0.0
    %v173 = vld [vmem:[%s2] sm:$0x1]
    %v174 = vadd.f32 %v172, 1e-05
    %v175 = vrsqrt.pop %v174
    %v176 = vmul.f32 %v173, %v175
    %v177 = vld [vmem:[%s3] sm:$0x1]
    %v178 = vmul.f32 %v167, %v176
    %v179 = vsub.f32 %v177, %v178
    %v180 = vlaneseq
    %v181 = vshrl.u32 %v180, 7
    %vm182 = vcmp.eq.s32.totalorder %v181, 0
    %vm183 = vcmp.eq.s32.totalorder %v181, 1
    %v185 = vlaneseq
    %v186 = vshrl.u32 %v185, 7
    %v187 = vsub.s32 0, %v186
    %v188 = vrot.slane %v179, %v187
    %v190 = vsel %vm183, %v188, 0.0
    %v192 = vlaneseq
    %v193 = vshrl.u32 %v192, 7
    %v194 = vsub.s32 0, %v193
    %v195 = vrot.slane %v176, %v194
    %v197 = vsel %vm182, %v195, %v190
    %198 = vst [vmem:[%s5] sm:$0xff] %v197
  $region25: #{shortcut_projection.2} parent=0 // pred_fallthru
    _
  // Predicated region
  $region26: #{shortcut_projection.2} parent=0 // pred_check
    _
  $region27: #{shortcut_projection.2} parent=0 // pred_check_branch
    %200 = sbr.rel (0) target = $region29
  $region28: #{shortcut_projection.2} parent=0 // pred_region
    _
  $region29: #{shortcut_projection.2} parent=0 // pred_fallthru
    _
  // Predicated region
  $region30: #{shortcut_projection.2} parent=0 // pred_check
    _
  $region31: #{shortcut_projection.2} parent=0 // pred_check_branch
    %202 = sbr.rel (0) target = $region33
  $region32: #{shortcut_projection.2} parent=0 // pred_region
    _
  $region33: #{shortcut_projection.2} parent=0 // pred_fallthru
    _
  // Predicated region
  $region34: #{shortcut_projection.2} parent=0 // pred_check
    _
  $region35: #{shortcut_projection.2} parent=0 // pred_check_branch
    %204 = sbr.rel (0) target = $region37
  $region36: #{shortcut_projection.2} parent=0 // pred_region
    _
  $region37: #{shortcut_projection.2} parent=0 // pred_fallthru
    _
  // Predicated region
  $region38: #{shortcut_projection.2} parent=0 // pred_check
    _
  $region39: #{shortcut_projection.2} parent=0 // pred_check_branch
    %206 = sbr.rel (0) target = $region41
  $region40: #{shortcut_projection.2} parent=0 // pred_region
    _
  $region41: #{shortcut_projection.2} parent=0 // pred_fallthru
    _

</llo_original>
